<compile_context>
chip_gen: v5e
topology: v5e:2x2
jax: 0.10.0
libtpu: 0.0.40
codegen_flags: <defaults>
</compile_context>

<pallas_src>
import jax
import jax.numpy as jnp
from jax.experimental import pallas as pl
from jax.experimental.pallas import tpu as pltpu


def _add_conv1x1_kernel(a_ref, b_ref, w_ref, o_ref):
    # a_ref, b_ref: (C_in, M) resident across grid; w_ref: (TN, C_in) tile;
    # o_ref: (TN, M) tile.
    x = a_ref[...] + b_ref[...]                       # fused elementwise add (VPU)
    o_ref[...] = jnp.dot(
        w_ref[...], x, preferred_element_type=jnp.float32
    ).astype(o_ref.dtype)                             # 1x1 conv as MXU matmul


def _pick_cout_tile(c_out):
    # 2-4 grid steps is the sweet spot for this tiny, DMA-bound problem.
    for tn in (456, 608, 384, 912, 304):
        if c_out % tn == 0 and tn % 8 == 0:
            return tn
    return c_out  # single step fallback


def add_conv1x1(x445, x430, weight):
    """x445, x430: NCHW float32 [N, Cin, H, W]; weight: [Cout, Cin, 1, 1]."""
    n, c_in, h, w = x445.shape
    c_out = weight.shape[0]
    m = n * h * w

    if n == 1:
        # Pure reshapes: NCHW with N=1 is already (C_in, H*W) contiguous.
        a = x445.reshape(c_in, m)
        b = x430.reshape(c_in, m)
    else:
        # General-N fallback (needs a real transpose).
        a = jnp.transpose(x445, (1, 0, 2, 3)).reshape(c_in, m)
        b = jnp.transpose(x430, (1, 0, 2, 3)).reshape(c_in, m)

    # (Cout, Cin, 1, 1) -> (Cout, Cin): pure reshape, no transpose.
    wm = weight.reshape(c_out, c_in)

    tn = _pick_cout_tile(c_out)
    grid = (c_out // tn,)

    out = pl.pallas_call(
        _add_conv1x1_kernel,
        out_shape=jax.ShapeDtypeStruct((c_out, m), jnp.float32),
        grid_spec=pltpu.PrefetchScalarGridSpec(
            num_scalar_prefetch=0,
            grid=grid,
            in_specs=[
                # inputs stay resident across the C_out axis (same block index)
                pl.BlockSpec((c_in, m), lambda j: (0, 0)),
                pl.BlockSpec((c_in, m), lambda j: (0, 0)),
                # weight streamed tile-by-tile along C_out
                pl.BlockSpec((tn, c_in), lambda j: (j, 0)),
            ],
            out_specs=pl.BlockSpec((tn, m), lambda j: (j, 0)),
        ),
        compiler_params=pltpu.CompilerParams(
            # independent C_out tiles -> shard across TensorCores on v7x,
            # and double-buffer the weight stream on v5e/v6e.
            dimension_semantics=("parallel",)
        ),
    )(a, b, wm)

    if n == 1:
        # (C_out, M) -> NCHW, pure reshape.
        return out.reshape(1, c_out, h, w)
    return jnp.transpose(out.reshape(c_out, n, h, w), (1, 0, 2, 3))


if __name__ == "__main__":
    key = jax.random.PRNGKey(0)
    k1, k2, k3 = jax.random.split(key, 3)

    N, C_IN, H, W = 1, 304, 7, 7
    C_OUT = 1824

    x445 = jax.random.normal(k1, (N, C_IN, H, W), dtype=jnp.float32)
    x430 = jax.random.normal(k2, (N, C_IN, H, W), dtype=jnp.float32)
    # Deterministic Conv2d weight init (kaiming-uniform-like bound for 1x1 conv)
    bound = 1.0 / (C_IN ** 0.5)
    weight = jax.random.uniform(
        k3, (C_OUT, C_IN, 1, 1), dtype=jnp.float32, minval=-bound, maxval=bound
    )

    y = add_conv1x1(x445, x430, weight)
    jax.block_until_ready(y)

    # Reference check against plain JAX
    ref = jnp.einsum(
        "nchw,oc->nohw", x445 + x430, weight.reshape(C_OUT, C_IN)
    )
    assert y.shape == (N, C_OUT, H, W), y.shape
    assert jnp.allclose(y, ref, atol=1e-4, rtol=1e-4)

    print("KERNEL_OK")
</pallas_src>

<mosaic_0001>
module attributes {stable_mosaic.version = 11 : i64} {
  func.func @_add_conv1x1_kernel(%arg0: i32, %arg1: memref<304x49xf32, #tpu.memory_space<vmem>>, %arg2: memref<304x49xf32, #tpu.memory_space<vmem>>, %arg3: memref<456x304xf32, #tpu.memory_space<vmem>>, %arg4: memref<456x49xf32, #tpu.memory_space<vmem>>) attributes {dimension_semantics = [#tpu.dimension_semantics<parallel>], iteration_bounds = array<i64: 4>, scalar_prefetch = 0 : i64, scratch_operands = 0 : i64, tpu.core_type = #tpu.core_type<tc>, window_params = [{pipeline_mode = #tpu.pipeline_mode<synchronous>, transform_indices = @transform_0, window_bounds = array<i64: 304, 49>}, {pipeline_mode = #tpu.pipeline_mode<synchronous>, transform_indices = @transform_1, window_bounds = array<i64: 304, 49>}, {transform_indices = @transform_2, window_bounds = array<i64: 456, 304>}, {transform_indices = @transform_3, window_bounds = array<i64: 456, 49>}]} {
    %c0 = arith.constant 0 : index
    %c0_0 = arith.constant 0 : index
    %0 = vector.load %arg1[%c0, %c0_0] : memref<304x49xf32, #tpu.memory_space<vmem>>, vector<304x49xf32>
    %c0_1 = arith.constant 0 : index
    %c0_2 = arith.constant 0 : index
    %1 = vector.load %arg2[%c0_1, %c0_2] : memref<304x49xf32, #tpu.memory_space<vmem>>, vector<304x49xf32>
    %2 = arith.addf %0, %1 : vector<304x49xf32>
    %c0_3 = arith.constant 0 : index
    %c0_4 = arith.constant 0 : index
    %3 = vector.load %arg3[%c0_3, %c0_4] : memref<456x304xf32, #tpu.memory_space<vmem>>, vector<456x304xf32>
    %cst = arith.constant dense<0.000000e+00> : vector<456x49xf32>
    %4 = tpu.matmul %3, %2, %cst {dimension_numbers = #tpu.dot_dimension_numbers<[1], [0], [0], [1], [0, 0, 1, 1], [], []>} : vector<456x304xf32>, vector<304x49xf32>, vector<456x49xf32> -> vector<456x49xf32>
    %c0_5 = arith.constant 0 : index
    %c0_6 = arith.constant 0 : index
    %5 = vector.load %arg4[%c0_5, %c0_6] : memref<456x49xf32, #tpu.memory_space<vmem>>, vector<456x49xf32>
    tpu.vector_store %arg4[%c0_5, %c0_6], %4 {strides = array<i32>} : memref<456x49xf32, #tpu.memory_space<vmem>>, vector<456x49xf32>,
    return
  }
  func.func @transform_0(%arg0: i32) -> (i32, i32) {
    %c0_i32 = arith.constant 0 : i32
    %c0_i32_0 = arith.constant 0 : i32
    %c0_i32_1 = arith.constant 0 : i32
    return %c0_i32, %c0_i32_0 : i32, i32
  }
  func.func @transform_1(%arg0: i32) -> (i32, i32) {
    %c0_i32 = arith.constant 0 : i32
    %c0_i32_0 = arith.constant 0 : i32
    %c0_i32_1 = arith.constant 0 : i32
    return %c0_i32, %c0_i32_0 : i32, i32
  }
  func.func @transform_2(%arg0: i32) -> (i32, i32) {
    %c0_i32 = arith.constant 0 : i32
    %c0_i32_0 = arith.constant 0 : i32
    return %arg0, %c0_i32 : i32, i32
  }
  func.func @transform_3(%arg0: i32) -> (i32, i32) {
    %c0_i32 = arith.constant 0 : i32
    %c0_i32_0 = arith.constant 0 : i32
    return %arg0, %c0_i32 : i32, i32
  }
}

</mosaic_0001>

<llo_original>
// kernel: tpu_custom_call.1
$region0: #{tpu_custom_call.1}
  #allocation0 [shape = 'u32[]', space=smem, size = 0x4, offset = 0x4, fixed_abs, tag = 'smem constant byte address 0x4 - core index']
  #allocation1 [shape = 'u32[72,128]{1,0:T(1,128)}', space=vmem, size = 0x9000, scoped, tag = 'internal scratch']
  %s0 = inlined_call_operand.vmem [shape: f32[304,49], index: 0, kind: input, shape index: {}]
  %s1 = inlined_call_operand.vmem [shape: f32[304,49], index: 1, kind: input, shape index: {}]
  %s2 = inlined_call_operand.vmem [shape: f32[1824,304], index: 2, kind: input, shape index: {}]
  %s3 = inlined_call_operand.vmem [shape: f32[1824,49], index: 3, kind: output, shape index: {}]
  %s4 = sld [smem:[#allocation0]]
  $region45: #{tpu_custom_call.1} parent=0
    _
  %s6 = ssub.s32 1, %s4
  %s7 = scalar_select 0, %s6, %s4
  loop: start=0, step=1, limit=6
  $region2: #{tpu_custom_call.1} parent=0 // loop_pre_header
    _
  $region3: #{tpu_custom_call.1} parent=0 // loop_header
    %s9 = sphi 0, %s13
    %p10 = scmp.ge.s32.totalorder %s9, 6
    %s17 = sphi 0, %s17
    %s19 = sphi 0, %s17
    %s20 = sphi 0, %s19
    %s34 = sphi 0, %s20
    %s38 = sphi 0, %s38
    %s40 = sphi 0, %s38
    %s41 = sphi 0, %s40
    %s55 = sphi 0, %s41
    %s61 = sphi 0, %s63
    %s64 = sphi 0, %s61
    %s65 = sphi 0, %s64
    %s81 = sphi 0, %s65
    %s87 = sphi 0, %s89
    %s90 = sphi 0, %s87
    %s91 = sphi 0, %s90
    %s107 = sphi 0, %s91
  $region4: #{tpu_custom_call.1} parent=0 // loop_header_branch
    %12 = sbr.rel (%p10) target = $region8
  $region5: #{tpu_custom_call.1} parent=0 // loop_body
    %s14 = ssub.s32 %s9, 1
    %s15 = ssub.s32 %s9, 2
    %s16 = sadd.s32 %s9, 1
    %s18 = sadd.s32 %s17, 1
    %p21 = scmp.eq.s32.totalorder %s9, 3
    %p22 = scmp.ne.s32.totalorder %s17, %s19
    %p23 = scmp.eq.s32.totalorder %s9, 0
    %p24 = por %p22, %p23
    %p25 = scmp.ne.s32.totalorder %s17, %s19
    %p26 = scmp.eq.s32.totalorder %s14, 3
    %p27 = por %p25, %p26
    %p28 = scmp.ne.s32.totalorder %s19, %s20
    %p29 = scmp.eq.s32.totalorder %s14, 0
    %p30 = por %p28, %p29
    %p31 = scmp.ne.s32.totalorder %s19, %s20
    %p32 = scmp.eq.s32.totalorder %s15, 3
    %p33 = por %p31, %p32
    %p35 = scmp.ne.s32.totalorder %s20, %s34
    %p36 = scmp.eq.s32.totalorder %s15, 0
    %p37 = por %p35, %p36
    %s39 = sadd.s32 %s38, 1
    %p42 = scmp.eq.s32.totalorder %s9, 3
    %p43 = scmp.ne.s32.totalorder %s38, %s40
    %p44 = scmp.eq.s32.totalorder %s9, 0
    %p45 = por %p43, %p44
    %p46 = scmp.ne.s32.totalorder %s38, %s40
    %p47 = scmp.eq.s32.totalorder %s14, 3
    %p48 = por %p46, %p47
    %p49 = scmp.ne.s32.totalorder %s40, %s41
    %p50 = scmp.eq.s32.totalorder %s14, 0
    %p51 = por %p49, %p50
    %p52 = scmp.ne.s32.totalorder %s40, %s41
    %p53 = scmp.eq.s32.totalorder %s15, 3
    %p54 = por %p52, %p53
    %p56 = scmp.ne.s32.totalorder %s41, %s55
    %p57 = scmp.eq.s32.totalorder %s15, 0
    %p58 = por %p56, %p57
    %s59 = ssub.s32 %s9, %s16
    %p60 = scmp.eq.s32.totalorder %s59, 0
    %s62 = sadd.s32 %s61, 1
    %s63 = scalar_select %p60, %s61, %s62
    %p66 = pneg %p60
    %p67 = scmp.eq.s32.totalorder %s9, 3
    %p68 = por %p66, %p67
    %p69 = scmp.ne.s32.totalorder %s61, %s64
    %p70 = scmp.eq.s32.totalorder %s9, 0
    %p71 = por %p69, %p70
    %p72 = scmp.ne.s32.totalorder %s61, %s64
    %p73 = scmp.eq.s32.totalorder %s14, 3
    %p74 = por %p72, %p73
    %p75 = scmp.ne.s32.totalorder %s64, %s65
    %p76 = scmp.eq.s32.totalorder %s14, 0
    %p77 = por %p75, %p76
    %p78 = scmp.ne.s32.totalorder %s64, %s65
    %p79 = scmp.eq.s32.totalorder %s15, 3
    %p80 = por %p78, %p79
    %p82 = scmp.ne.s32.totalorder %s65, %s81
    %p83 = scmp.eq.s32.totalorder %s15, 0
    %p84 = por %p82, %p83
    %s85 = ssub.s32 %s9, %s16
    %p86 = scmp.eq.s32.totalorder %s85, 0
    %s88 = sadd.s32 %s87, 1
    %s89 = scalar_select %p86, %s87, %s88
    %p92 = pneg %p86
    %p93 = scmp.eq.s32.totalorder %s9, 3
    %p94 = por %p92, %p93
    %p95 = scmp.ne.s32.totalorder %s87, %s90
    %p96 = scmp.eq.s32.totalorder %s9, 0
    %p97 = por %p95, %p96
    %p98 = scmp.ne.s32.totalorder %s87, %s90
    %p99 = scmp.eq.s32.totalorder %s14, 3
    %p100 = por %p98, %p99
    %p101 = scmp.ne.s32.totalorder %s90, %s91
    %p102 = scmp.eq.s32.totalorder %s14, 0
    %p103 = por %p101, %p102
    %p104 = scmp.ne.s32.totalorder %s90, %s91
    %p105 = scmp.eq.s32.totalorder %s15, 3
    %p106 = por %p104, %p105
    %p108 = scmp.ne.s32.totalorder %s91, %s107
    %p109 = scmp.eq.s32.totalorder %s15, 0
    %p110 = por %p108, %p109
    %p111 = scmp.le.s32.totalorder 1, %s9
    %p112 = scmp.lt.s32.totalorder %s9, 5
    %p113 = pnand %p111, %p112
    %p114 = pneg %p113
    // Predicated region
    $region9: #{tpu_custom_call.1} parent=5 // pred_check
      _
    $region10: #{tpu_custom_call.1} parent=5 // pred_check_branch
      %116 = sbr.rel (%p113) target = $region12
    $region11: #{tpu_custom_call.1} parent=5 // pred_region
      %s117 = ssub.s32 %s9, 1
      // Predicated region
      $region13: #{tpu_custom_call.1} parent=11 // pred_check
        %p118 = pneg %p30
      $region14: #{tpu_custom_call.1} parent=11 // pred_check_branch
        %120 = sbr.rel (%p118) target = $region16
      $region15: #{tpu_custom_call.1} parent=11 // pred_region
        _
      $region16: #{tpu_custom_call.1} parent=11 // pred_fallthru
        _
      // Predicated region
      $region17: #{tpu_custom_call.1} parent=11 // pred_check
        %p121 = pneg %p51
      $region18: #{tpu_custom_call.1} parent=11 // pred_check_branch
        %123 = sbr.rel (%p121) target = $region20
      $region19: #{tpu_custom_call.1} parent=11 // pred_region
        _
      $region20: #{tpu_custom_call.1} parent=11 // pred_fallthru
        _
    $region12: #{tpu_custom_call.1} parent=5 // pred_fallthru
      _
    %p124 = scmp.lt.s32.totalorder %s9, 4
    // Predicated region
    $region21: #{tpu_custom_call.1} parent=5 // pred_check
      %p125 = pneg %p124
    $region22: #{tpu_custom_call.1} parent=5 // pred_check_branch
      %127 = sbr.rel (%p125) target = $region24
    $region23: #{tpu_custom_call.1} parent=5 // pred_region
      // Predicated region
      $region25: #{tpu_custom_call.1} parent=23 // pred_check
        %p128 = pneg %p71
      $region26: #{tpu_custom_call.1} parent=23 // pred_check_branch
        %130 = sbr.rel (%p128) target = $region28
      $region27: #{tpu_custom_call.1} parent=23 // pred_region
        %s131 = smul.u32 57, %s9
        %p132 = scmp.lt.s32.totalorder %s131, 227
        %s133 = scalar_select %p132, %s131, 227
        %s134 = smul.addr %s133, 3
        %s135 = smul.addr %s134, 8
        %s136 = scalar_lea.vmem %s2, %s135
        %s137 = smul.u32 57, %s9
      $region28: #{tpu_custom_call.1} parent=23 // pred_fallthru
        _
    $region24: #{tpu_custom_call.1} parent=5 // pred_fallthru
      _
    %p138 = scmp.le.s32.totalorder 1, %s9
    %p139 = scmp.lt.s32.totalorder %s9, 5
    %p140 = pnand %p138, %p139
    %p141 = pneg %p140
    // Predicated region
    $region29: #{tpu_custom_call.1} parent=5 // pred_check
      _
    $region30: #{tpu_custom_call.1} parent=5 // pred_check_branch
      %143 = sbr.rel (%p140) target = $region32
    $region31: #{tpu_custom_call.1} parent=5 // pred_region
      %s144 = ssub.s32 %s9, 1
      %p145 = pneg %p30
      %p146 = pneg %p27
      %p147 = pneg %p51
      %p148 = pneg %p48
      %s149 = smul.u32 57, %s14
      %p150 = scmp.lt.s32.totalorder %s149, 227
      %s151 = scalar_select %p150, %s149, 227
      %s152 = smul.addr %s151, 3
      %s153 = smul.addr %s152, 8
      %s154 = scalar_lea.vmem %s2, %s153
      %p155 = pneg %p77
      %p156 = pneg %p74
      %p157 = pneg %p103
      %p158 = pneg %p100
      %s159 = smul.u32 57, %s14
      %p160 = scmp.lt.s32.totalorder %s159, 227
      %s161 = scalar_select %p160, %s159, 227
      %s162 = smul.addr %s161, 8
      %s163 = scalar_lea.vmem %s3, %s162
      %s164 = smul.u32 57, %s14
      %p165 = scmp.lt.s32.totalorder %s164, 227
      %s166 = scalar_select %p165, %s164, 227
      %s167 = smul.addr %s166, 3
      %s168 = smul.addr %s167, 8
      %s169 = scalar_lea.vmem %s2, %s168
      %s170 = smul.u32 57, %s14
      %s171 = smul.u32 57, %s14
      %p172 = scmp.lt.s32.totalorder %s171, 227
      %s173 = scalar_select %p172, %s171, 227
      %s174 = smul.addr %s173, 8
      %s175 = scalar_lea.vmem %s3, %s174
      %s176 = smul.u32 57, %s14
      %v177 = vld [vmem:[%s0] sm:$0xff]
      %v178 = vld [vmem:[%s0 + $0x8] sm:$0xff]
      %v179 = vld [vmem:[%s0 + $0x10] sm:$0xff]
      %v180 = vld [vmem:[%s0 + $0x18] sm:$0xff]
      %v181 = vld [vmem:[%s0 + $0x20] sm:$0xff]
      %v182 = vld [vmem:[%s0 + $0x28] sm:$0xff]
      %v183 = vld [vmem:[%s0 + $0x30] sm:$0xff]
      %v184 = vld [vmem:[%s0 + $0x38] sm:$0xff]
      %v185 = vld [vmem:[%s0 + $0x40] sm:$0xff]
      %v186 = vld [vmem:[%s0 + $0x48] sm:$0xff]
      %v187 = vld [vmem:[%s0 + $0x50] sm:$0xff]
      %v188 = vld [vmem:[%s0 + $0x58] sm:$0xff]
      %v189 = vld [vmem:[%s0 + $0x60] sm:$0xff]
      %v190 = vld [vmem:[%s0 + $0x68] sm:$0xff]
      %v191 = vld [vmem:[%s0 + $0x70] sm:$0xff]
      %v192 = vld [vmem:[%s0 + $0x78] sm:$0xff]
      %v193 = vld [vmem:[%s0 + $0x80] sm:$0xff]
      %v194 = vld [vmem:[%s0 + $0x88] sm:$0xff]
      %v195 = vld [vmem:[%s0 + $0x90] sm:$0xff]
      %v196 = vld [vmem:[%s0 + $0x98] sm:$0xff]
      %v197 = vld [vmem:[%s0 + $0xa0] sm:$0xff]
      %v198 = vld [vmem:[%s0 + $0xa8] sm:$0xff]
      %v199 = vld [vmem:[%s0 + $0xb0] sm:$0xff]
      %v200 = vld [vmem:[%s0 + $0xb8] sm:$0xff]
      %v201 = vld [vmem:[%s0 + $0xc0] sm:$0xff]
      %v202 = vld [vmem:[%s0 + $0xc8] sm:$0xff]
      %v203 = vld [vmem:[%s0 + $0xd0] sm:$0xff]
      %v204 = vld [vmem:[%s0 + $0xd8] sm:$0xff]
      %v205 = vld [vmem:[%s0 + $0xe0] sm:$0xff]
      %v206 = vld [vmem:[%s0 + $0xe8] sm:$0xff]
      %v207 = vld [vmem:[%s0 + $0xf0] sm:$0xff]
      %v208 = vld [vmem:[%s0 + $0xf8] sm:$0xff]
      %v209 = vld [vmem:[%s0 + $0x100] sm:$0xff]
      %v210 = vld [vmem:[%s0 + $0x108] sm:$0xff]
      %v211 = vld [vmem:[%s0 + $0x110] sm:$0xff]
      %v212 = vld [vmem:[%s0 + $0x118] sm:$0xff]
      %v213 = vld [vmem:[%s0 + $0x120] sm:$0xff]
      %v214 = vld [vmem:[%s0 + $0x128] sm:$0xff]
      %v215 = vld [vmem:[%s1] sm:$0xff]
      %v216 = vld [vmem:[%s1 + $0x8] sm:$0xff]
      %v217 = vld [vmem:[%s1 + $0x10] sm:$0xff]
      %v218 = vld [vmem:[%s1 + $0x18] sm:$0xff]
      %v219 = vld [vmem:[%s1 + $0x20] sm:$0xff]
      %v220 = vld [vmem:[%s1 + $0x28] sm:$0xff]
      %v221 = vld [vmem:[%s1 + $0x30] sm:$0xff]
      %v222 = vld [vmem:[%s1 + $0x38] sm:$0xff]
      %v223 = vld [vmem:[%s1 + $0x40] sm:$0xff]
      %v224 = vld [vmem:[%s1 + $0x48] sm:$0xff]
      %v225 = vld [vmem:[%s1 + $0x50] sm:$0xff]
      %v226 = vld [vmem:[%s1 + $0x58] sm:$0xff]
      %v227 = vld [vmem:[%s1 + $0x60] sm:$0xff]
      %v228 = vld [vmem:[%s1 + $0x68] sm:$0xff]
      %v229 = vld [vmem:[%s1 + $0x70] sm:$0xff]
      %v230 = vld [vmem:[%s1 + $0x78] sm:$0xff]
      %v231 = vld [vmem:[%s1 + $0x80] sm:$0xff]
      %v232 = vld [vmem:[%s1 + $0x88] sm:$0xff]
      %v233 = vld [vmem:[%s1 + $0x90] sm:$0xff]
      %v234 = vld [vmem:[%s1 + $0x98] sm:$0xff]
      %v235 = vld [vmem:[%s1 + $0xa0] sm:$0xff]
      %v236 = vld [vmem:[%s1 + $0xa8] sm:$0xff]
      %v237 = vld [vmem:[%s1 + $0xb0] sm:$0xff]
      %v238 = vld [vmem:[%s1 + $0xb8] sm:$0xff]
      %v239 = vld [vmem:[%s1 + $0xc0] sm:$0xff]
      %v240 = vld [vmem:[%s1 + $0xc8] sm:$0xff]
      %v241 = vld [vmem:[%s1 + $0xd0] sm:$0xff]
      %v242 = vld [vmem:[%s1 + $0xd8] sm:$0xff]
      %v243 = vld [vmem:[%s1 + $0xe0] sm:$0xff]
      %v244 = vld [vmem:[%s1 + $0xe8] sm:$0xff]
      %v245 = vld [vmem:[%s1 + $0xf0] sm:$0xff]
      %v246 = vld [vmem:[%s1 + $0xf8] sm:$0xff]
      %v247 = vld [vmem:[%s1 + $0x100] sm:$0xff]
      %v248 = vld [vmem:[%s1 + $0x108] sm:$0xff]
      %v249 = vld [vmem:[%s1 + $0x110] sm:$0xff]
      %v250 = vld [vmem:[%s1 + $0x118] sm:$0xff]
      %v251 = vld [vmem:[%s1 + $0x120] sm:$0xff]
      %v252 = vld [vmem:[%s1 + $0x128] sm:$0xff]
      %v253 = vadd.f32 %v177, %v215
      %v254 = vadd.f32 %v178, %v216
      %v255 = vadd.f32 %v179, %v217
      %v256 = vadd.f32 %v180, %v218
      %v257 = vadd.f32 %v181, %v219
      %v258 = vadd.f32 %v182, %v220
      %v259 = vadd.f32 %v183, %v221
      %v260 = vadd.f32 %v184, %v222
      %v261 = vadd.f32 %v185, %v223
      %v262 = vadd.f32 %v186, %v224
      %v263 = vadd.f32 %v187, %v225
      %v264 = vadd.f32 %v188, %v226
      %v265 = vadd.f32 %v189, %v227
      %v266 = vadd.f32 %v190, %v228
      %v267 = vadd.f32 %v191, %v229
      %v268 = vadd.f32 %v192, %v230
      %v269 = vadd.f32 %v193, %v231
      %v270 = vadd.f32 %v194, %v232
      %v271 = vadd.f32 %v195, %v233
      %v272 = vadd.f32 %v196, %v234
      %v273 = vadd.f32 %v197, %v235
      %v274 = vadd.f32 %v198, %v236
      %v275 = vadd.f32 %v199, %v237
      %v276 = vadd.f32 %v200, %v238
      %v277 = vadd.f32 %v201, %v239
      %v278 = vadd.f32 %v202, %v240
      %v279 = vadd.f32 %v203, %v241
      %v280 = vadd.f32 %v204, %v242
      %v281 = vadd.f32 %v205, %v243
      %v282 = vadd.f32 %v206, %v244
      %v283 = vadd.f32 %v207, %v245
      %v284 = vadd.f32 %v208, %v246
      %v285 = vadd.f32 %v209, %v247
      %v286 = vadd.f32 %v210, %v248
      %v287 = vadd.f32 %v211, %v249
      %v288 = vadd.f32 %v212, %v250
      %v289 = vadd.f32 %v213, %v251
      %v290 = vadd.f32 %v214, %v252
      %v291 = vld [vmem:[%s169] sm:$0xff]
      %v292 = vld [vmem:[%s169 + $0x8] sm:$0xff]
      %v293 = vld [vmem:[%s169 + $0x10] sm:$0xff]
      %v294 = vld [vmem:[%s169 + $0x18] sm:$0xff]
      %v295 = vld [vmem:[%s169 + $0x20] sm:$0xff]
      %v296 = vld [vmem:[%s169 + $0x28] sm:$0xff]
      %v297 = vld [vmem:[%s169 + $0x30] sm:$0xff]
      %v298 = vld [vmem:[%s169 + $0x38] sm:$0xff]
      %v299 = vld [vmem:[%s169 + $0x40] sm:$0xff]
      %v300 = vld [vmem:[%s169 + $0x48] sm:$0xff]
      %v301 = vld [vmem:[%s169 + $0x50] sm:$0xff]
      %v302 = vld [vmem:[%s169 + $0x58] sm:$0xff]
      %v303 = vld [vmem:[%s169 + $0x60] sm:$0xff]
      %v304 = vld [vmem:[%s169 + $0x68] sm:$0xff]
      %v305 = vld [vmem:[%s169 + $0x70] sm:$0xff]
      %v306 = vld [vmem:[%s169 + $0x78] sm:$0xff]
      %v307 = vld [vmem:[%s169 + $0x80] sm:$0xff]
      %v308 = vld [vmem:[%s169 + $0x88] sm:$0xff]
      %v309 = vld [vmem:[%s169 + $0x90] sm:$0xff]
      %v310 = vld [vmem:[%s169 + $0x98] sm:$0xff]
      %v311 = vld [vmem:[%s169 + $0xa0] sm:$0xff]
      %v312 = vld [vmem:[%s169 + $0xa8] sm:$0xff]
      %v313 = vld [vmem:[%s169 + $0xb0] sm:$0xff]
      %v314 = vld [vmem:[%s169 + $0xb8] sm:$0xff]
      %v315 = vld [vmem:[%s169 + $0xc0] sm:$0xff]
      %v316 = vld [vmem:[%s169 + $0xc8] sm:$0xff]
      %v317 = vld [vmem:[%s169 + $0xd0] sm:$0xff]
      %v318 = vld [vmem:[%s169 + $0xd8] sm:$0xff]
      %v319 = vld [vmem:[%s169 + $0xe0] sm:$0xff]
      %v320 = vld [vmem:[%s169 + $0xe8] sm:$0xff]
      %v321 = vld [vmem:[%s169 + $0xf0] sm:$0xff]
      %v322 = vld [vmem:[%s169 + $0xf8] sm:$0xff]
      %v323 = vld [vmem:[%s169 + $0x100] sm:$0xff]
      %v324 = vld [vmem:[%s169 + $0x108] sm:$0xff]
      %v325 = vld [vmem:[%s169 + $0x110] sm:$0xff]
      %v326 = vld [vmem:[%s169 + $0x118] sm:$0xff]
      %v327 = vld [vmem:[%s169 + $0x120] sm:$0xff]
      %v328 = vld [vmem:[%s169 + $0x128] sm:$0xff]
      %v329 = vld [vmem:[%s169 + $0x130] sm:$0xff]
      %v330 = vld [vmem:[%s169 + $0x138] sm:$0xff]
      %v331 = vld [vmem:[%s169 + $0x140] sm:$0xff]
      %v332 = vld [vmem:[%s169 + $0x148] sm:$0xff]
      %v333 = vld [vmem:[%s169 + $0x150] sm:$0xff]
      %v334 = vld [vmem:[%s169 + $0x158] sm:$0xff]
      %v335 = vld [vmem:[%s169 + $0x160] sm:$0xff]
      %v336 = vld [vmem:[%s169 + $0x168] sm:$0xff]
      %v337 = vld [vmem:[%s169 + $0x170] sm:$0xff]
      %v338 = vld [vmem:[%s169 + $0x178] sm:$0xff]
      %v339 = vld [vmem:[%s169 + $0x180] sm:$0xff]
      %v340 = vld [vmem:[%s169 + $0x188] sm:$0xff]
      %v341 = vld [vmem:[%s169 + $0x190] sm:$0xff]
      %v342 = vld [vmem:[%s169 + $0x198] sm:$0xff]
      %v343 = vld [vmem:[%s169 + $0x1a0] sm:$0xff]
      %v344 = vld [vmem:[%s169 + $0x1a8] sm:$0xff]
      %v345 = vld [vmem:[%s169 + $0x1b0] sm:$0xff]
      %v346 = vld [vmem:[%s169 + $0x1b8] sm:$0xff]
      %v347 = vld [vmem:[%s169 + $0x1c0] sm:$0xff]
      %v348 = vld [vmem:[%s169 + $0x1c8] sm:$0xff]
      %v349 = vld [vmem:[%s169 + $0x1d0] sm:$0xff]
      %v350 = vld [vmem:[%s169 + $0x1d8] sm:$0xff]
      %v351 = vld [vmem:[%s169 + $0x1e0] sm:$0xff]
      %v352 = vld [vmem:[%s169 + $0x1e8] sm:$0xff]
      %v353 = vld [vmem:[%s169 + $0x1f0] sm:$0xff]
      %v354 = vld [vmem:[%s169 + $0x1f8] sm:$0xff]
      %v355 = vld [vmem:[%s169 + $0x200] sm:$0xff]
      %v356 = vld [vmem:[%s169 + $0x208] sm:$0xff]
      %v357 = vld [vmem:[%s169 + $0x210] sm:$0xff]
      %v358 = vld [vmem:[%s169 + $0x218] sm:$0xff]
      %v359 = vld [vmem:[%s169 + $0x220] sm:$0xff]
      %v360 = vld [vmem:[%s169 + $0x228] sm:$0xff]
      %v361 = vld [vmem:[%s169 + $0x230] sm:$0xff]
      %v362 = vld [vmem:[%s169 + $0x238] sm:$0xff]
      %v363 = vld [vmem:[%s169 + $0x240] sm:$0xff]
      %v364 = vld [vmem:[%s169 + $0x248] sm:$0xff]
      %v365 = vld [vmem:[%s169 + $0x250] sm:$0xff]
      %v366 = vld [vmem:[%s169 + $0x258] sm:$0xff]
      %v367 = vld [vmem:[%s169 + $0x260] sm:$0xff]
      %v368 = vld [vmem:[%s169 + $0x268] sm:$0xff]
      %v369 = vld [vmem:[%s169 + $0x270] sm:$0xff]
      %v370 = vld [vmem:[%s169 + $0x278] sm:$0xff]
      %v371 = vld [vmem:[%s169 + $0x280] sm:$0xff]
      %v372 = vld [vmem:[%s169 + $0x288] sm:$0xff]
      %v373 = vld [vmem:[%s169 + $0x290] sm:$0xff]
      %v374 = vld [vmem:[%s169 + $0x298] sm:$0xff]
      %v375 = vld [vmem:[%s169 + $0x2a0] sm:$0xff]
      %v376 = vld [vmem:[%s169 + $0x2a8] sm:$0xff]
      %v377 = vld [vmem:[%s169 + $0x2b0] sm:$0xff]
      %v378 = vld [vmem:[%s169 + $0x2b8] sm:$0xff]
      %v379 = vld [vmem:[%s169 + $0x2c0] sm:$0xff]
      %v380 = vld [vmem:[%s169 + $0x2c8] sm:$0xff]
      %v381 = vld [vmem:[%s169 + $0x2d0] sm:$0xff]
      %v382 = vld [vmem:[%s169 + $0x2d8] sm:$0xff]
      %v383 = vld [vmem:[%s169 + $0x2e0] sm:$0xff]
      %v384 = vld [vmem:[%s169 + $0x2e8] sm:$0xff]
      %v385 = vld [vmem:[%s169 + $0x2f0] sm:$0xff]
      %v386 = vld [vmem:[%s169 + $0x2f8] sm:$0xff]
      %v387 = vld [vmem:[%s169 + $0x300] sm:$0xff]
      %v388 = vld [vmem:[%s169 + $0x308] sm:$0xff]
      %v389 = vld [vmem:[%s169 + $0x310] sm:$0xff]
      %v390 = vld [vmem:[%s169 + $0x318] sm:$0xff]
      %v391 = vld [vmem:[%s169 + $0x320] sm:$0xff]
      %v392 = vld [vmem:[%s169 + $0x328] sm:$0xff]
      %v393 = vld [vmem:[%s169 + $0x330] sm:$0xff]
      %v394 = vld [vmem:[%s169 + $0x338] sm:$0xff]
      %v395 = vld [vmem:[%s169 + $0x340] sm:$0xff]
      %v396 = vld [vmem:[%s169 + $0x348] sm:$0xff]
      %v397 = vld [vmem:[%s169 + $0x350] sm:$0xff]
      %v398 = vld [vmem:[%s169 + $0x358] sm:$0xff]
      %v399 = vld [vmem:[%s169 + $0x360] sm:$0xff]
      %v400 = vld [vmem:[%s169 + $0x368] sm:$0xff]
      %v401 = vld [vmem:[%s169 + $0x370] sm:$0xff]
      %v402 = vld [vmem:[%s169 + $0x378] sm:$0xff]
      %v403 = vld [vmem:[%s169 + $0x380] sm:$0xff]
      %v404 = vld [vmem:[%s169 + $0x388] sm:$0xff]
      %v405 = vld [vmem:[%s169 + $0x390] sm:$0xff]
      %v406 = vld [vmem:[%s169 + $0x398] sm:$0xff]
      %v407 = vld [vmem:[%s169 + $0x3a0] sm:$0xff]
      %v408 = vld [vmem:[%s169 + $0x3a8] sm:$0xff]
      %v409 = vld [vmem:[%s169 + $0x3b0] sm:$0xff]
      %v410 = vld [vmem:[%s169 + $0x3b8] sm:$0xff]
      %v411 = vld [vmem:[%s169 + $0x3c0] sm:$0xff]
      %v412 = vld [vmem:[%s169 + $0x3c8] sm:$0xff]
      %v413 = vld [vmem:[%s169 + $0x3d0] sm:$0xff]
      %v414 = vld [vmem:[%s169 + $0x3d8] sm:$0xff]
      %v415 = vld [vmem:[%s169 + $0x3e0] sm:$0xff]
      %v416 = vld [vmem:[%s169 + $0x3e8] sm:$0xff]
      %v417 = vld [vmem:[%s169 + $0x3f0] sm:$0xff]
      %v418 = vld [vmem:[%s169 + $0x3f8] sm:$0xff]
      %v419 = vld [vmem:[%s169 + $0x400] sm:$0xff]
      %v420 = vld [vmem:[%s169 + $0x408] sm:$0xff]
      %v421 = vld [vmem:[%s169 + $0x410] sm:$0xff]
      %v422 = vld [vmem:[%s169 + $0x418] sm:$0xff]
      %v423 = vld [vmem:[%s169 + $0x420] sm:$0xff]
      %v424 = vld [vmem:[%s169 + $0x428] sm:$0xff]
      %v425 = vld [vmem:[%s169 + $0x430] sm:$0xff]
      %v426 = vld [vmem:[%s169 + $0x438] sm:$0xff]
      %v427 = vld [vmem:[%s169 + $0x440] sm:$0xff]
      %v428 = vld [vmem:[%s169 + $0x448] sm:$0xff]
      %v429 = vld [vmem:[%s169 + $0x450] sm:$0xff]
      %v430 = vld [vmem:[%s169 + $0x458] sm:$0xff]
      %v431 = vld [vmem:[%s169 + $0x460] sm:$0xff]
      %v432 = vld [vmem:[%s169 + $0x468] sm:$0xff]
      %v433 = vld [vmem:[%s169 + $0x470] sm:$0xff]
      %v434 = vld [vmem:[%s169 + $0x478] sm:$0xff]
      %v435 = vld [vmem:[%s169 + $0x480] sm:$0xff]
      %v436 = vld [vmem:[%s169 + $0x488] sm:$0xff]
      %v437 = vld [vmem:[%s169 + $0x490] sm:$0xff]
      %v438 = vld [vmem:[%s169 + $0x498] sm:$0xff]
      %v439 = vld [vmem:[%s169 + $0x4a0] sm:$0xff]
      %v440 = vld [vmem:[%s169 + $0x4a8] sm:$0xff]
      %v441 = vld [vmem:[%s169 + $0x4b0] sm:$0xff]
      %v442 = vld [vmem:[%s169 + $0x4b8] sm:$0xff]
      %v443 = vld [vmem:[%s169 + $0x4c0] sm:$0xff]
      %v444 = vld [vmem:[%s169 + $0x4c8] sm:$0xff]
      %v445 = vld [vmem:[%s169 + $0x4d0] sm:$0xff]
      %v446 = vld [vmem:[%s169 + $0x4d8] sm:$0xff]
      %v447 = vld [vmem:[%s169 + $0x4e0] sm:$0xff]
      %v448 = vld [vmem:[%s169 + $0x4e8] sm:$0xff]
      %v449 = vld [vmem:[%s169 + $0x4f0] sm:$0xff]
      %v450 = vld [vmem:[%s169 + $0x4f8] sm:$0xff]
      %v451 = vld [vmem:[%s169 + $0x500] sm:$0xff]
      %v452 = vld [vmem:[%s169 + $0x508] sm:$0xff]
      %v453 = vld [vmem:[%s169 + $0x510] sm:$0xff]
      %v454 = vld [vmem:[%s169 + $0x518] sm:$0xff]
      %v455 = vld [vmem:[%s169 + $0x520] sm:$0xff]
      %v456 = vld [vmem:[%s169 + $0x528] sm:$0xff]
      %v457 = vld [vmem:[%s169 + $0x530] sm:$0xff]
      %v458 = vld [vmem:[%s169 + $0x538] sm:$0xff]
      %v459 = vld [vmem:[%s169 + $0x540] sm:$0xff]
      %v460 = vld [vmem:[%s169 + $0x548] sm:$0xff]
      %v461 = vld [vmem:[%s169 + $0x550] sm:$0xff]
      %vm462 = vcmask 392192
      %v464 = vsel %vm462, %v293, 0
      %v467 = vsel %vm462, %v296, 0
      %v470 = vsel %vm462, %v299, 0
      %v473 = vsel %vm462, %v302, 0
      %v476 = vsel %vm462, %v305, 0
      %v479 = vsel %vm462, %v308, 0
      %v482 = vsel %vm462, %v311, 0
      %v485 = vsel %vm462, %v314, 0
      %v488 = vsel %vm462, %v317, 0
      %v491 = vsel %vm462, %v320, 0
      %v494 = vsel %vm462, %v323, 0
      %v497 = vsel %vm462, %v326, 0
      %v500 = vsel %vm462, %v329, 0
      %v503 = vsel %vm462, %v332, 0
      %v506 = vsel %vm462, %v335, 0
      %v509 = vsel %vm462, %v338, 0
      %v512 = vsel %vm462, %v341, 0
      %v515 = vsel %vm462, %v344, 0
      %v518 = vsel %vm462, %v347, 0
      %v521 = vsel %vm462, %v350, 0
      %v524 = vsel %vm462, %v353, 0
      %v527 = vsel %vm462, %v356, 0
      %v530 = vsel %vm462, %v359, 0
      %v533 = vsel %vm462, %v362, 0
      %v536 = vsel %vm462, %v365, 0
      %v539 = vsel %vm462, %v368, 0
      %v542 = vsel %vm462, %v371, 0
      %v545 = vsel %vm462, %v374, 0
      %v548 = vsel %vm462, %v377, 0
      %v551 = vsel %vm462, %v380, 0
      %v554 = vsel %vm462, %v383, 0
      %v557 = vsel %vm462, %v386, 0
      %v560 = vsel %vm462, %v389, 0
      %v563 = vsel %vm462, %v392, 0
      %v566 = vsel %vm462, %v395, 0
      %v569 = vsel %vm462, %v398, 0
      %v572 = vsel %vm462, %v401, 0
      %v575 = vsel %vm462, %v404, 0
      %v578 = vsel %vm462, %v407, 0
      %v581 = vsel %vm462, %v410, 0
      %v584 = vsel %vm462, %v413, 0
      %v587 = vsel %vm462, %v416, 0
      %v590 = vsel %vm462, %v419, 0
      %v593 = vsel %vm462, %v422, 0
      %v596 = vsel %vm462, %v425, 0
      %v599 = vsel %vm462, %v428, 0
      %v602 = vsel %vm462, %v431, 0
      %v605 = vsel %vm462, %v434, 0
      %v608 = vsel %vm462, %v437, 0
      %v611 = vsel %vm462, %v440, 0
      %v614 = vsel %vm462, %v443, 0
      %v617 = vsel %vm462, %v446, 0
      %v620 = vsel %vm462, %v449, 0
      %v623 = vsel %vm462, %v452, 0
      %v626 = vsel %vm462, %v455, 0
      %v629 = vsel %vm462, %v458, 0
      %v632 = vsel %vm462, %v461, 0
      %634 = vmatpush.msra.mxu0 %v268
      %635 = vmatpush.msra.mxu0 %v267
      %636 = vmatpush.msra.mxu0 %v266
      %637 = vmatpush.msra.mxu0 %v265
      %638 = vmatpush.msra.mxu0 %v264
      %639 = vmatpush.msra.mxu0 %v263
      %640 = vmatpush.msra.mxu0 %v262
      %641 = vmatpush.msra.mxu0 %v261
      %642 = vmatpush.msra.mxu0 %v260
      %643 = vmatpush.msra.mxu0 %v259
      %644 = vmatpush.msra.mxu0 %v258
      %645 = vmatpush.msra.mxu0 %v257
      %646 = vmatpush.msra.mxu0 %v256
      %647 = vmatpush.msra.mxu0 %v255
      %648 = vmatpush.msra.mxu0 %v254
      %649 = vmatpush.msra.mxu0 %v253
      %650 = vmatmul.f32.gmra.mxu0 %v291
      %v651 = vpop.f32.mrf.mxu0
      %v652 = vadd.f32 0.0, %v651
      %653 = vmatmul.f32.gmra.mxu0 %v294
      %v654 = vpop.f32.mrf.mxu0
      %v655 = vadd.f32 0.0, %v654
      %656 = vmatmul.f32.gmra.mxu0 %v297
      %v657 = vpop.f32.mrf.mxu0
      %v658 = vadd.f32 0.0, %v657
      %659 = vmatmul.f32.gmra.mxu0 %v300
      %v660 = vpop.f32.mrf.mxu0
      %v661 = vadd.f32 0.0, %v660
      %662 = vmatmul.f32.gmra.mxu0 %v303
      %v663 = vpop.f32.mrf.mxu0
      %v664 = vadd.f32 0.0, %v663
      %665 = vmatmul.f32.gmra.mxu0 %v306
      %v666 = vpop.f32.mrf.mxu0
      %v667 = vadd.f32 0.0, %v666
      %668 = vmatmul.f32.gmra.mxu0 %v309
      %v669 = vpop.f32.mrf.mxu0
      %v670 = vadd.f32 0.0, %v669
      %671 = vmatmul.f32.gmra.mxu0 %v312
      %v672 = vpop.f32.mrf.mxu0
      %v673 = vadd.f32 0.0, %v672
      %674 = vmatmul.f32.gmra.mxu0 %v315
      %v675 = vpop.f32.mrf.mxu0
      %v676 = vadd.f32 0.0, %v675
      %677 = vmatmul.f32.gmra.mxu0 %v318
      %v678 = vpop.f32.mrf.mxu0
      %v679 = vadd.f32 0.0, %v678
      %680 = vmatmul.f32.gmra.mxu0 %v321
      %v681 = vpop.f32.mrf.mxu0
      %v682 = vadd.f32 0.0, %v681
      %683 = vmatmul.f32.gmra.mxu0 %v324
      %v684 = vpop.f32.mrf.mxu0
      %v685 = vadd.f32 0.0, %v684
      %686 = vmatmul.f32.gmra.mxu0 %v327
      %v687 = vpop.f32.mrf.mxu0
      %v688 = vadd.f32 0.0, %v687
      %689 = vmatmul.f32.gmra.mxu0 %v330
      %v690 = vpop.f32.mrf.mxu0
      %v691 = vadd.f32 0.0, %v690
      %692 = vmatmul.f32.gmra.mxu0 %v333
      %v693 = vpop.f32.mrf.mxu0
      %v694 = vadd.f32 0.0, %v693
      %695 = vmatmul.f32.gmra.mxu0 %v336
      %v696 = vpop.f32.mrf.mxu0
      %v697 = vadd.f32 0.0, %v696
      %698 = vmatmul.f32.gmra.mxu0 %v339
      %v699 = vpop.f32.mrf.mxu0
      %v700 = vadd.f32 0.0, %v699
      %701 = vmatmul.f32.gmra.mxu0 %v342
      %v702 = vpop.f32.mrf.mxu0
      %v703 = vadd.f32 0.0, %v702
      %704 = vmatmul.f32.gmra.mxu0 %v345
      %v705 = vpop.f32.mrf.mxu0
      %v706 = vadd.f32 0.0, %v705
      %707 = vmatmul.f32.gmra.mxu0 %v348
      %v708 = vpop.f32.mrf.mxu0
      %v709 = vadd.f32 0.0, %v708
      %710 = vmatmul.f32.gmra.mxu0 %v351
      %v711 = vpop.f32.mrf.mxu0
      %v712 = vadd.f32 0.0, %v711
      %713 = vmatmul.f32.gmra.mxu0 %v354
      %v714 = vpop.f32.mrf.mxu0
      %v715 = vadd.f32 0.0, %v714
      %716 = vmatmul.f32.gmra.mxu0 %v357
      %v717 = vpop.f32.mrf.mxu0
      %v718 = vadd.f32 0.0, %v717
      %719 = vmatmul.f32.gmra.mxu0 %v360
      %v720 = vpop.f32.mrf.mxu0
      %v721 = vadd.f32 0.0, %v720
      %722 = vmatmul.f32.gmra.mxu0 %v363
      %v723 = vpop.f32.mrf.mxu0
      %v724 = vadd.f32 0.0, %v723
      %725 = vmatmul.f32.gmra.mxu0 %v366
      %v726 = vpop.f32.mrf.mxu0
      %v727 = vadd.f32 0.0, %v726
      %728 = vmatmul.f32.gmra.mxu0 %v369
      %v729 = vpop.f32.mrf.mxu0
      %v730 = vadd.f32 0.0, %v729
      %731 = vmatmul.f32.gmra.mxu0 %v372
      %v732 = vpop.f32.mrf.mxu0
      %v733 = vadd.f32 0.0, %v732
      %734 = vmatmul.f32.gmra.mxu0 %v375
      %v735 = vpop.f32.mrf.mxu0
      %v736 = vadd.f32 0.0, %v735
      %737 = vmatmul.f32.gmra.mxu0 %v378
      %v738 = vpop.f32.mrf.mxu0
      %v739 = vadd.f32 0.0, %v738
      %740 = vmatmul.f32.gmra.mxu0 %v381
      %v741 = vpop.f32.mrf.mxu0
      %v742 = vadd.f32 0.0, %v741
      %743 = vmatmul.f32.gmra.mxu0 %v384
      %v744 = vpop.f32.mrf.mxu0
      %v745 = vadd.f32 0.0, %v744
      %746 = vmatmul.f32.gmra.mxu0 %v387
      %v747 = vpop.f32.mrf.mxu0
      %v748 = vadd.f32 0.0, %v747
      %749 = vmatmul.f32.gmra.mxu0 %v390
      %v750 = vpop.f32.mrf.mxu0
      %v751 = vadd.f32 0.0, %v750
      %752 = vmatmul.f32.gmra.mxu0 %v393
      %v753 = vpop.f32.mrf.mxu0
      %v754 = vadd.f32 0.0, %v753
      %755 = vmatmul.f32.gmra.mxu0 %v396
      %v756 = vpop.f32.mrf.mxu0
      %v757 = vadd.f32 0.0, %v756
      %758 = vmatmul.f32.gmra.mxu0 %v399
      %v759 = vpop.f32.mrf.mxu0
      %v760 = vadd.f32 0.0, %v759
      %761 = vmatmul.f32.gmra.mxu0 %v402
      %v762 = vpop.f32.mrf.mxu0
      %v763 = vadd.f32 0.0, %v762
      %764 = vmatmul.f32.gmra.mxu0 %v405
      %v765 = vpop.f32.mrf.mxu0
      %v766 = vadd.f32 0.0, %v765
      %767 = vmatmul.f32.gmra.mxu0 %v408
      %v768 = vpop.f32.mrf.mxu0
      %v769 = vadd.f32 0.0, %v768
      %770 = vmatmul.f32.gmra.mxu0 %v411
      %v771 = vpop.f32.mrf.mxu0
      %v772 = vadd.f32 0.0, %v771
      %773 = vmatmul.f32.gmra.mxu0 %v414
      %v774 = vpop.f32.mrf.mxu0
      %v775 = vadd.f32 0.0, %v774
      %776 = vmatmul.f32.gmra.mxu0 %v417
      %v777 = vpop.f32.mrf.mxu0
      %v778 = vadd.f32 0.0, %v777
      %779 = vmatmul.f32.gmra.mxu0 %v420
      %v780 = vpop.f32.mrf.mxu0
      %v781 = vadd.f32 0.0, %v780
      %782 = vmatmul.f32.gmra.mxu0 %v423
      %v783 = vpop.f32.mrf.mxu0
      %v784 = vadd.f32 0.0, %v783
      %785 = vmatmul.f32.gmra.mxu0 %v426
      %v786 = vpop.f32.mrf.mxu0
      %v787 = vadd.f32 0.0, %v786
      %788 = vmatmul.f32.gmra.mxu0 %v429
      %v789 = vpop.f32.mrf.mxu0
      %v790 = vadd.f32 0.0, %v789
      %791 = vmatmul.f32.gmra.mxu0 %v432
      %v792 = vpop.f32.mrf.mxu0
      %v793 = vadd.f32 0.0, %v792
      %794 = vmatmul.f32.gmra.mxu0 %v435
      %v795 = vpop.f32.mrf.mxu0
      %v796 = vadd.f32 0.0, %v795
      %797 = vmatmul.f32.gmra.mxu0 %v438
      %v798 = vpop.f32.mrf.mxu0
      %v799 = vadd.f32 0.0, %v798
      %800 = vmatmul.f32.gmra.mxu0 %v441
      %v801 = vpop.f32.mrf.mxu0
      %v802 = vadd.f32 0.0, %v801
      %803 = vmatmul.f32.gmra.mxu0 %v444
      %v804 = vpop.f32.mrf.mxu0
      %v805 = vadd.f32 0.0, %v804
      %806 = vmatmul.f32.gmra.mxu0 %v447
      %v807 = vpop.f32.mrf.mxu0
      %v808 = vadd.f32 0.0, %v807
      %809 = vmatmul.f32.gmra.mxu0 %v450
      %v810 = vpop.f32.mrf.mxu0
      %v811 = vadd.f32 0.0, %v810
      %812 = vmatmul.f32.gmra.mxu0 %v453
      %v813 = vpop.f32.mrf.mxu0
      %v814 = vadd.f32 0.0, %v813
      %815 = vmatmul.f32.gmra.mxu0 %v456
      %v816 = vpop.f32.mrf.mxu0
      %v817 = vadd.f32 0.0, %v816
      %818 = vmatmul.f32.gmra.mxu0 %v459
      %v819 = vpop.f32.mrf.mxu0
      %v820 = vadd.f32 0.0, %v819
      %821 = vdwg.mxu0
      %822 = vmatpush.msra.mxu0 %v284
      %823 = vmatpush.msra.mxu0 %v283
      %824 = vmatpush.msra.mxu0 %v282
      %825 = vmatpush.msra.mxu0 %v281
      %826 = vmatpush.msra.mxu0 %v280
      %827 = vmatpush.msra.mxu0 %v279
      %828 = vmatpush.msra.mxu0 %v278
      %829 = vmatpush.msra.mxu0 %v277
      %830 = vmatpush.msra.mxu0 %v276
      %831 = vmatpush.msra.mxu0 %v275
      %832 = vmatpush.msra.mxu0 %v274
      %833 = vmatpush.msra.mxu0 %v273
      %834 = vmatpush.msra.mxu0 %v272
      %835 = vmatpush.msra.mxu0 %v271
      %836 = vmatpush.msra.mxu0 %v270
      %837 = vmatpush.msra.mxu0 %v269
      %838 = vmatmul.f32.gmra.mxu0 %v292
      %v839 = vpop.f32.mrf.mxu0
      %v840 = vadd.f32 %v652, %v839
      %841 = vmatmul.f32.gmra.mxu0 %v295
      %v842 = vpop.f32.mrf.mxu0
      %v843 = vadd.f32 %v655, %v842
      %844 = vmatmul.f32.gmra.mxu0 %v298
      %v845 = vpop.f32.mrf.mxu0
      %v846 = vadd.f32 %v658, %v845
      %847 = vmatmul.f32.gmra.mxu0 %v301
      %v848 = vpop.f32.mrf.mxu0
      %v849 = vadd.f32 %v661, %v848
      %850 = vmatmul.f32.gmra.mxu0 %v304
      %v851 = vpop.f32.mrf.mxu0
      %v852 = vadd.f32 %v664, %v851
      %853 = vmatmul.f32.gmra.mxu0 %v307
      %v854 = vpop.f32.mrf.mxu0
      %v855 = vadd.f32 %v667, %v854
      %856 = vmatmul.f32.gmra.mxu0 %v310
      %v857 = vpop.f32.mrf.mxu0
      %v858 = vadd.f32 %v670, %v857
      %859 = vmatmul.f32.gmra.mxu0 %v313
      %v860 = vpop.f32.mrf.mxu0
      %v861 = vadd.f32 %v673, %v860
      %862 = vmatmul.f32.gmra.mxu0 %v316
      %v863 = vpop.f32.mrf.mxu0
      %v864 = vadd.f32 %v676, %v863
      %865 = vmatmul.f32.gmra.mxu0 %v319
      %v866 = vpop.f32.mrf.mxu0
      %v867 = vadd.f32 %v679, %v866
      %868 = vmatmul.f32.gmra.mxu0 %v322
      %v869 = vpop.f32.mrf.mxu0
      %v870 = vadd.f32 %v682, %v869
      %871 = vmatmul.f32.gmra.mxu0 %v325
      %v872 = vpop.f32.mrf.mxu0
      %v873 = vadd.f32 %v685, %v872
      %874 = vmatmul.f32.gmra.mxu0 %v328
      %v875 = vpop.f32.mrf.mxu0
      %v876 = vadd.f32 %v688, %v875
      %877 = vmatmul.f32.gmra.mxu0 %v331
      %v878 = vpop.f32.mrf.mxu0
      %v879 = vadd.f32 %v691, %v878
      %880 = vmatmul.f32.gmra.mxu0 %v334
      %v881 = vpop.f32.mrf.mxu0
      %v882 = vadd.f32 %v694, %v881
      %883 = vmatmul.f32.gmra.mxu0 %v337
      %v884 = vpop.f32.mrf.mxu0
      %v885 = vadd.f32 %v697, %v884
      %886 = vmatmul.f32.gmra.mxu0 %v340
      %v887 = vpop.f32.mrf.mxu0
      %v888 = vadd.f32 %v700, %v887
      %889 = vmatmul.f32.gmra.mxu0 %v343
      %v890 = vpop.f32.mrf.mxu0
      %v891 = vadd.f32 %v703, %v890
      %892 = vmatmul.f32.gmra.mxu0 %v346
      %v893 = vpop.f32.mrf.mxu0
      %v894 = vadd.f32 %v706, %v893
      %895 = vmatmul.f32.gmra.mxu0 %v349
      %v896 = vpop.f32.mrf.mxu0
      %v897 = vadd.f32 %v709, %v896
      %898 = vmatmul.f32.gmra.mxu0 %v352
      %v899 = vpop.f32.mrf.mxu0
      %v900 = vadd.f32 %v712, %v899
      %901 = vmatmul.f32.gmra.mxu0 %v355
      %v902 = vpop.f32.mrf.mxu0
      %v903 = vadd.f32 %v715, %v902
      %904 = vmatmul.f32.gmra.mxu0 %v358
      %v905 = vpop.f32.mrf.mxu0
      %v906 = vadd.f32 %v718, %v905
      %907 = vmatmul.f32.gmra.mxu0 %v361
      %v908 = vpop.f32.mrf.mxu0
      %v909 = vadd.f32 %v721, %v908
      %910 = vmatmul.f32.gmra.mxu0 %v364
      %v911 = vpop.f32.mrf.mxu0
      %v912 = vadd.f32 %v724, %v911
      %913 = vmatmul.f32.gmra.mxu0 %v367
      %v914 = vpop.f32.mrf.mxu0
      %v915 = vadd.f32 %v727, %v914
      %916 = vmatmul.f32.gmra.mxu0 %v370
      %v917 = vpop.f32.mrf.mxu0
      %v918 = vadd.f32 %v730, %v917
      %919 = vmatmul.f32.gmra.mxu0 %v373
      %v920 = vpop.f32.mrf.mxu0
      %v921 = vadd.f32 %v733, %v920
      %922 = vmatmul.f32.gmra.mxu0 %v376
      %v923 = vpop.f32.mrf.mxu0
      %v924 = vadd.f32 %v736, %v923
      %925 = vmatmul.f32.gmra.mxu0 %v379
      %v926 = vpop.f32.mrf.mxu0
      %v927 = vadd.f32 %v739, %v926
      %928 = vmatmul.f32.gmra.mxu0 %v382
      %v929 = vpop.f32.mrf.mxu0
      %v930 = vadd.f32 %v742, %v929
      %931 = vmatmul.f32.gmra.mxu0 %v385
      %v932 = vpop.f32.mrf.mxu0
      %v933 = vadd.f32 %v745, %v932
      %934 = vmatmul.f32.gmra.mxu0 %v388
      %v935 = vpop.f32.mrf.mxu0
      %v936 = vadd.f32 %v748, %v935
      %937 = vmatmul.f32.gmra.mxu0 %v391
      %v938 = vpop.f32.mrf.mxu0
      %v939 = vadd.f32 %v751, %v938
      %940 = vmatmul.f32.gmra.mxu0 %v394
      %v941 = vpop.f32.mrf.mxu0
      %v942 = vadd.f32 %v754, %v941
      %943 = vmatmul.f32.gmra.mxu0 %v397
      %v944 = vpop.f32.mrf.mxu0
      %v945 = vadd.f32 %v757, %v944
      %946 = vmatmul.f32.gmra.mxu0 %v400
      %v947 = vpop.f32.mrf.mxu0
      %v948 = vadd.f32 %v760, %v947
      %949 = vmatmul.f32.gmra.mxu0 %v403
      %v950 = vpop.f32.mrf.mxu0
      %v951 = vadd.f32 %v763, %v950
      %952 = vmatmul.f32.gmra.mxu0 %v406
      %v953 = vpop.f32.mrf.mxu0
      %v954 = vadd.f32 %v766, %v953
      %955 = vmatmul.f32.gmra.mxu0 %v409
      %v956 = vpop.f32.mrf.mxu0
      %v957 = vadd.f32 %v769, %v956
      %958 = vmatmul.f32.gmra.mxu0 %v412
      %v959 = vpop.f32.mrf.mxu0
      %v960 = vadd.f32 %v772, %v959
      %961 = vmatmul.f32.gmra.mxu0 %v415
      %v962 = vpop.f32.mrf.mxu0
      %v963 = vadd.f32 %v775, %v962
      %964 = vmatmul.f32.gmra.mxu0 %v418
      %v965 = vpop.f32.mrf.mxu0
      %v966 = vadd.f32 %v778, %v965
      %967 = vmatmul.f32.gmra.mxu0 %v421
      %v968 = vpop.f32.mrf.mxu0
      %v969 = vadd.f32 %v781, %v968
      %970 = vmatmul.f32.gmra.mxu0 %v424
      %v971 = vpop.f32.mrf.mxu0
      %v972 = vadd.f32 %v784, %v971
      %973 = vmatmul.f32.gmra.mxu0 %v427
      %v974 = vpop.f32.mrf.mxu0
      %v975 = vadd.f32 %v787, %v974
      %976 = vmatmul.f32.gmra.mxu0 %v430
      %v977 = vpop.f32.mrf.mxu0
      %v978 = vadd.f32 %v790, %v977
      %979 = vmatmul.f32.gmra.mxu0 %v433
      %v980 = vpop.f32.mrf.mxu0
      %v981 = vadd.f32 %v793, %v980
      %982 = vmatmul.f32.gmra.mxu0 %v436
      %v983 = vpop.f32.mrf.mxu0
      %v984 = vadd.f32 %v796, %v983
      %985 = vmatmul.f32.gmra.mxu0 %v439
      %v986 = vpop.f32.mrf.mxu0
      %v987 = vadd.f32 %v799, %v986
      %988 = vmatmul.f32.gmra.mxu0 %v442
      %v989 = vpop.f32.mrf.mxu0
      %v990 = vadd.f32 %v802, %v989
      %991 = vmatmul.f32.gmra.mxu0 %v445
      %v992 = vpop.f32.mrf.mxu0
      %v993 = vadd.f32 %v805, %v992
      %994 = vmatmul.f32.gmra.mxu0 %v448
      %v995 = vpop.f32.mrf.mxu0
      %v996 = vadd.f32 %v808, %v995
      %997 = vmatmul.f32.gmra.mxu0 %v451
      %v998 = vpop.f32.mrf.mxu0
      %v999 = vadd.f32 %v811, %v998
      %1000 = vmatmul.f32.gmra.mxu0 %v454
      %v1001 = vpop.f32.mrf.mxu0
      %v1002 = vadd.f32 %v814, %v1001
      %1003 = vmatmul.f32.gmra.mxu0 %v457
      %v1004 = vpop.f32.mrf.mxu0
      %v1005 = vadd.f32 %v817, %v1004
      %1006 = vmatmul.f32.gmra.mxu0 %v460
      %v1007 = vpop.f32.mrf.mxu0
      %v1008 = vadd.f32 %v820, %v1007
      %1009 = vdwg.mxu0
      %1010 = vmatpush.msra.mxu0 0.0
      %1011 = vmatpush.msra.mxu0 0.0
      %1012 = vmatpush.msra.mxu0 0.0
      %1013 = vmatpush.msra.mxu0 0.0
      %1014 = vmatpush.msra.mxu0 0.0
      %1015 = vmatpush.msra.mxu0 0.0
      %1016 = vmatpush.msra.mxu0 0.0
      %1017 = vmatpush.msra.mxu0 0.0
      %1018 = vmatpush.msra.mxu0 0.0
      %1019 = vmatpush.msra.mxu0 0.0
      %1020 = vmatpush.msra.mxu0 %v290
      %1021 = vmatpush.msra.mxu0 %v289
      %1022 = vmatpush.msra.mxu0 %v288
      %1023 = vmatpush.msra.mxu0 %v287
      %1024 = vmatpush.msra.mxu0 %v286
      %1025 = vmatpush.msra.mxu0 %v285
      %1026 = vmatmul.f32.gmra.mxu0 %v464
      %v1027 = vpop.f32.mrf.mxu0
      %v1028 = vadd.f32 %v840, %v1027
      %1029 = vmatmul.f32.gmra.mxu0 %v467
      %v1030 = vpop.f32.mrf.mxu0
      %v1031 = vadd.f32 %v843, %v1030
      %1032 = vmatmul.f32.gmra.mxu0 %v470
      %v1033 = vpop.f32.mrf.mxu0
      %v1034 = vadd.f32 %v846, %v1033
      %1035 = vmatmul.f32.gmra.mxu0 %v473
      %v1036 = vpop.f32.mrf.mxu0
      %v1037 = vadd.f32 %v849, %v1036
      %1038 = vmatmul.f32.gmra.mxu0 %v476
      %v1039 = vpop.f32.mrf.mxu0
      %v1040 = vadd.f32 %v852, %v1039
      %1041 = vmatmul.f32.gmra.mxu0 %v479
      %v1042 = vpop.f32.mrf.mxu0
      %v1043 = vadd.f32 %v855, %v1042
      %1044 = vmatmul.f32.gmra.mxu0 %v482
      %v1045 = vpop.f32.mrf.mxu0
      %v1046 = vadd.f32 %v858, %v1045
      %1047 = vmatmul.f32.gmra.mxu0 %v485
      %v1048 = vpop.f32.mrf.mxu0
      %v1049 = vadd.f32 %v861, %v1048
      %1050 = vmatmul.f32.gmra.mxu0 %v488
      %v1051 = vpop.f32.mrf.mxu0
      %v1052 = vadd.f32 %v864, %v1051
      %1053 = vmatmul.f32.gmra.mxu0 %v491
      %v1054 = vpop.f32.mrf.mxu0
      %v1055 = vadd.f32 %v867, %v1054
      %1056 = vmatmul.f32.gmra.mxu0 %v494
      %v1057 = vpop.f32.mrf.mxu0
      %v1058 = vadd.f32 %v870, %v1057
      %1059 = vmatmul.f32.gmra.mxu0 %v497
      %v1060 = vpop.f32.mrf.mxu0
      %v1061 = vadd.f32 %v873, %v1060
      %1062 = vmatmul.f32.gmra.mxu0 %v500
      %v1063 = vpop.f32.mrf.mxu0
      %v1064 = vadd.f32 %v876, %v1063
      %1065 = vmatmul.f32.gmra.mxu0 %v503
      %v1066 = vpop.f32.mrf.mxu0
      %v1067 = vadd.f32 %v879, %v1066
      %1068 = vmatmul.f32.gmra.mxu0 %v506
      %v1069 = vpop.f32.mrf.mxu0
      %v1070 = vadd.f32 %v882, %v1069
      %1071 = vmatmul.f32.gmra.mxu0 %v509
      %v1072 = vpop.f32.mrf.mxu0
      %v1073 = vadd.f32 %v885, %v1072
      %1074 = vmatmul.f32.gmra.mxu0 %v512
      %v1075 = vpop.f32.mrf.mxu0
      %v1076 = vadd.f32 %v888, %v1075
      %1077 = vmatmul.f32.gmra.mxu0 %v515
      %v1078 = vpop.f32.mrf.mxu0
      %v1079 = vadd.f32 %v891, %v1078
      %1080 = vmatmul.f32.gmra.mxu0 %v518
      %v1081 = vpop.f32.mrf.mxu0
      %v1082 = vadd.f32 %v894, %v1081
      %1083 = vmatmul.f32.gmra.mxu0 %v521
      %v1084 = vpop.f32.mrf.mxu0
      %v1085 = vadd.f32 %v897, %v1084
      %1086 = vmatmul.f32.gmra.mxu0 %v524
      %v1087 = vpop.f32.mrf.mxu0
      %v1088 = vadd.f32 %v900, %v1087
      %1089 = vmatmul.f32.gmra.mxu0 %v527
      %v1090 = vpop.f32.mrf.mxu0
      %v1091 = vadd.f32 %v903, %v1090
      %1092 = vmatmul.f32.gmra.mxu0 %v530
      %v1093 = vpop.f32.mrf.mxu0
      %v1094 = vadd.f32 %v906, %v1093
      %1095 = vmatmul.f32.gmra.mxu0 %v533
      %v1096 = vpop.f32.mrf.mxu0
      %v1097 = vadd.f32 %v909, %v1096
      %1098 = vmatmul.f32.gmra.mxu0 %v536
      %v1099 = vpop.f32.mrf.mxu0
      %v1100 = vadd.f32 %v912, %v1099
      %1101 = vmatmul.f32.gmra.mxu0 %v539
      %v1102 = vpop.f32.mrf.mxu0
      %v1103 = vadd.f32 %v915, %v1102
      %1104 = vmatmul.f32.gmra.mxu0 %v542
      %v1105 = vpop.f32.mrf.mxu0
      %v1106 = vadd.f32 %v918, %v1105
      %1107 = vmatmul.f32.gmra.mxu0 %v545
      %v1108 = vpop.f32.mrf.mxu0
      %v1109 = vadd.f32 %v921, %v1108
      %1110 = vmatmul.f32.gmra.mxu0 %v548
      %v1111 = vpop.f32.mrf.mxu0
      %v1112 = vadd.f32 %v924, %v1111
      %1113 = vmatmul.f32.gmra.mxu0 %v551
      %v1114 = vpop.f32.mrf.mxu0
      %v1115 = vadd.f32 %v927, %v1114
      %1116 = vmatmul.f32.gmra.mxu0 %v554
      %v1117 = vpop.f32.mrf.mxu0
      %v1118 = vadd.f32 %v930, %v1117
      %1119 = vmatmul.f32.gmra.mxu0 %v557
      %v1120 = vpop.f32.mrf.mxu0
      %v1121 = vadd.f32 %v933, %v1120
      %1122 = vmatmul.f32.gmra.mxu0 %v560
      %v1123 = vpop.f32.mrf.mxu0
      %v1124 = vadd.f32 %v936, %v1123
      %1125 = vmatmul.f32.gmra.mxu0 %v563
      %v1126 = vpop.f32.mrf.mxu0
      %v1127 = vadd.f32 %v939, %v1126
      %1128 = vmatmul.f32.gmra.mxu0 %v566
      %v1129 = vpop.f32.mrf.mxu0
      %v1130 = vadd.f32 %v942, %v1129
      %1131 = vmatmul.f32.gmra.mxu0 %v569
      %v1132 = vpop.f32.mrf.mxu0
      %v1133 = vadd.f32 %v945, %v1132
      %1134 = vmatmul.f32.gmra.mxu0 %v572
      %v1135 = vpop.f32.mrf.mxu0
      %v1136 = vadd.f32 %v948, %v1135
      %1137 = vmatmul.f32.gmra.mxu0 %v575
      %v1138 = vpop.f32.mrf.mxu0
      %v1139 = vadd.f32 %v951, %v1138
      %1140 = vmatmul.f32.gmra.mxu0 %v578
      %v1141 = vpop.f32.mrf.mxu0
      %v1142 = vadd.f32 %v954, %v1141
      %1143 = vmatmul.f32.gmra.mxu0 %v581
      %v1144 = vpop.f32.mrf.mxu0
      %v1145 = vadd.f32 %v957, %v1144
      %1146 = vmatmul.f32.gmra.mxu0 %v584
      %v1147 = vpop.f32.mrf.mxu0
      %v1148 = vadd.f32 %v960, %v1147
      %1149 = vmatmul.f32.gmra.mxu0 %v587
      %v1150 = vpop.f32.mrf.mxu0
      %v1151 = vadd.f32 %v963, %v1150
      %1152 = vmatmul.f32.gmra.mxu0 %v590
      %v1153 = vpop.f32.mrf.mxu0
      %v1154 = vadd.f32 %v966, %v1153
      %1155 = vmatmul.f32.gmra.mxu0 %v593
      %v1156 = vpop.f32.mrf.mxu0
      %v1157 = vadd.f32 %v969, %v1156
      %1158 = vmatmul.f32.gmra.mxu0 %v596
      %v1159 = vpop.f32.mrf.mxu0
      %v1160 = vadd.f32 %v972, %v1159
      %1161 = vmatmul.f32.gmra.mxu0 %v599
      %v1162 = vpop.f32.mrf.mxu0
      %v1163 = vadd.f32 %v975, %v1162
      %1164 = vmatmul.f32.gmra.mxu0 %v602
      %v1165 = vpop.f32.mrf.mxu0
      %v1166 = vadd.f32 %v978, %v1165
      %1167 = vmatmul.f32.gmra.mxu0 %v605
      %v1168 = vpop.f32.mrf.mxu0
      %v1169 = vadd.f32 %v981, %v1168
      %1170 = vmatmul.f32.gmra.mxu0 %v608
      %v1171 = vpop.f32.mrf.mxu0
      %v1172 = vadd.f32 %v984, %v1171
      %1173 = vmatmul.f32.gmra.mxu0 %v611
      %v1174 = vpop.f32.mrf.mxu0
      %v1175 = vadd.f32 %v987, %v1174
      %1176 = vmatmul.f32.gmra.mxu0 %v614
      %v1177 = vpop.f32.mrf.mxu0
      %v1178 = vadd.f32 %v990, %v1177
      %1179 = vmatmul.f32.gmra.mxu0 %v617
      %v1180 = vpop.f32.mrf.mxu0
      %v1181 = vadd.f32 %v993, %v1180
      %1182 = vmatmul.f32.gmra.mxu0 %v620
      %v1183 = vpop.f32.mrf.mxu0
      %v1184 = vadd.f32 %v996, %v1183
      %1185 = vmatmul.f32.gmra.mxu0 %v623
      %v1186 = vpop.f32.mrf.mxu0
      %v1187 = vadd.f32 %v999, %v1186
      %1188 = vmatmul.f32.gmra.mxu0 %v626
      %v1189 = vpop.f32.mrf.mxu0
      %v1190 = vadd.f32 %v1002, %v1189
      %1191 = vmatmul.f32.gmra.mxu0 %v629
      %v1192 = vpop.f32.mrf.mxu0
      %v1193 = vadd.f32 %v1005, %v1192
      %1194 = vmatmul.f32.gmra.mxu0 %v632
      %v1195 = vpop.f32.mrf.mxu0
      %v1196 = vadd.f32 %v1008, %v1195
      %1197 = vdwg.mxu0
      %vm1198 = vcmask 400384
      %1199 = vst.msk [vmem:[%s175] sm:$0xff] %vm1198, %v1028
      %1200 = vst.msk [vmem:[%s175 + $0x8] sm:$0xff] %vm1198, %v1031
      %1201 = vst.msk [vmem:[%s175 + $0x10] sm:$0xff] %vm1198, %v1034
      %1202 = vst.msk [vmem:[%s175 + $0x18] sm:$0xff] %vm1198, %v1037
      %1203 = vst.msk [vmem:[%s175 + $0x20] sm:$0xff] %vm1198, %v1040
      %1204 = vst.msk [vmem:[%s175 + $0x28] sm:$0xff] %vm1198, %v1043
      %1205 = vst.msk [vmem:[%s175 + $0x30] sm:$0xff] %vm1198, %v1046
      %1206 = vst.msk [vmem:[%s175 + $0x38] sm:$0xff] %vm1198, %v1049
      %1207 = vst.msk [vmem:[%s175 + $0x40] sm:$0xff] %vm1198, %v1052
      %1208 = vst.msk [vmem:[%s175 + $0x48] sm:$0xff] %vm1198, %v1055
      %1209 = vst.msk [vmem:[%s175 + $0x50] sm:$0xff] %vm1198, %v1058
      %1210 = vst.msk [vmem:[%s175 + $0x58] sm:$0xff] %vm1198, %v1061
      %1211 = vst.msk [vmem:[%s175 + $0x60] sm:$0xff] %vm1198, %v1064
      %1212 = vst.msk [vmem:[%s175 + $0x68] sm:$0xff] %vm1198, %v1067
      %1213 = vst.msk [vmem:[%s175 + $0x70] sm:$0xff] %vm1198, %v1070
      %1214 = vst.msk [vmem:[%s175 + $0x78] sm:$0xff] %vm1198, %v1073
      %1215 = vst.msk [vmem:[%s175 + $0x80] sm:$0xff] %vm1198, %v1076
      %1216 = vst.msk [vmem:[%s175 + $0x88] sm:$0xff] %vm1198, %v1079
      %1217 = vst.msk [vmem:[%s175 + $0x90] sm:$0xff] %vm1198, %v1082
      %1218 = vst.msk [vmem:[%s175 + $0x98] sm:$0xff] %vm1198, %v1085
      %1219 = vst.msk [vmem:[%s175 + $0xa0] sm:$0xff] %vm1198, %v1088
      %1220 = vst.msk [vmem:[%s175 + $0xa8] sm:$0xff] %vm1198, %v1091
      %1221 = vst.msk [vmem:[%s175 + $0xb0] sm:$0xff] %vm1198, %v1094
      %1222 = vst.msk [vmem:[%s175 + $0xb8] sm:$0xff] %vm1198, %v1097
      %1223 = vst.msk [vmem:[%s175 + $0xc0] sm:$0xff] %vm1198, %v1100
      %1224 = vst.msk [vmem:[%s175 + $0xc8] sm:$0xff] %vm1198, %v1103
      %1225 = vst.msk [vmem:[%s175 + $0xd0] sm:$0xff] %vm1198, %v1106
      %1226 = vst.msk [vmem:[%s175 + $0xd8] sm:$0xff] %vm1198, %v1109
      %1227 = vst.msk [vmem:[%s175 + $0xe0] sm:$0xff] %vm1198, %v1112
      %1228 = vst.msk [vmem:[%s175 + $0xe8] sm:$0xff] %vm1198, %v1115
      %1229 = vst.msk [vmem:[%s175 + $0xf0] sm:$0xff] %vm1198, %v1118
      %1230 = vst.msk [vmem:[%s175 + $0xf8] sm:$0xff] %vm1198, %v1121
      %1231 = vst.msk [vmem:[%s175 + $0x100] sm:$0xff] %vm1198, %v1124
      %1232 = vst.msk [vmem:[%s175 + $0x108] sm:$0xff] %vm1198, %v1127
      %1233 = vst.msk [vmem:[%s175 + $0x110] sm:$0xff] %vm1198, %v1130
      %1234 = vst.msk [vmem:[%s175 + $0x118] sm:$0xff] %vm1198, %v1133
      %1235 = vst.msk [vmem:[%s175 + $0x120] sm:$0xff] %vm1198, %v1136
      %1236 = vst.msk [vmem:[%s175 + $0x128] sm:$0xff] %vm1198, %v1139
      %1237 = vst.msk [vmem:[%s175 + $0x130] sm:$0xff] %vm1198, %v1142
      %1238 = vst.msk [vmem:[%s175 + $0x138] sm:$0xff] %vm1198, %v1145
      %1239 = vst.msk [vmem:[%s175 + $0x140] sm:$0xff] %vm1198, %v1148
      %1240 = vst.msk [vmem:[%s175 + $0x148] sm:$0xff] %vm1198, %v1151
      %1241 = vst.msk [vmem:[%s175 + $0x150] sm:$0xff] %vm1198, %v1154
      %1242 = vst.msk [vmem:[%s175 + $0x158] sm:$0xff] %vm1198, %v1157
      %1243 = vst.msk [vmem:[%s175 + $0x160] sm:$0xff] %vm1198, %v1160
      %1244 = vst.msk [vmem:[%s175 + $0x168] sm:$0xff] %vm1198, %v1163
      %1245 = vst.msk [vmem:[%s175 + $0x170] sm:$0xff] %vm1198, %v1166
      %1246 = vst.msk [vmem:[%s175 + $0x178] sm:$0xff] %vm1198, %v1169
      %1247 = vst.msk [vmem:[%s175 + $0x180] sm:$0xff] %vm1198, %v1172
      %1248 = vst.msk [vmem:[%s175 + $0x188] sm:$0xff] %vm1198, %v1175
      %1249 = vst.msk [vmem:[%s175 + $0x190] sm:$0xff] %vm1198, %v1178
      %1250 = vst.msk [vmem:[%s175 + $0x198] sm:$0xff] %vm1198, %v1181
      %1251 = vst.msk [vmem:[%s175 + $0x1a0] sm:$0xff] %vm1198, %v1184
      %1252 = vst.msk [vmem:[%s175 + $0x1a8] sm:$0xff] %vm1198, %v1187
      %1253 = vst.msk [vmem:[%s175 + $0x1b0] sm:$0xff] %vm1198, %v1190
      %1254 = vst.msk [vmem:[%s175 + $0x1b8] sm:$0xff] %vm1198, %v1193
      %1255 = vst.msk [vmem:[%s175 + $0x1c0] sm:$0xff] %vm1198, %v1196
      %s1256 = smul.u32 57, %s14
      %p1257 = scmp.lt.s32.totalorder %s1256, 227
      %s1258 = scalar_select %p1257, %s1256, 227
      %s1259 = smul.addr %s1258, 8
      %s1260 = scalar_lea.vmem %s3, %s1259
      // Predicated region
      $region33: #{tpu_custom_call.1} parent=31 // pred_check
        %p1261 = pneg %p100
      $region34: #{tpu_custom_call.1} parent=31 // pred_check_branch
        %1263 = sbr.rel (%p1261) target = $region36
      $region35: #{tpu_custom_call.1} parent=31 // pred_region
        %s1264 = smul.u32 57, %s14
      $region36: #{tpu_custom_call.1} parent=31 // pred_fallthru
        _
    $region32: #{tpu_custom_call.1} parent=5 // pred_fallthru
      _
    %p1265 = scmp.le.s32.totalorder 2, %s9
    // Predicated region
    $region37: #{tpu_custom_call.1} parent=5 // pred_check
      %p1266 = pneg %p1265
    $region38: #{tpu_custom_call.1} parent=5 // pred_check_branch
      %1268 = sbr.rel (%p1266) target = $region40
    $region39: #{tpu_custom_call.1} parent=5 // pred_region
      %s1269 = ssub.s32 %s9, 2
      // Predicated region
      $region41: #{tpu_custom_call.1} parent=39 // pred_check
        %p1270 = pneg %p106
      $region42: #{tpu_custom_call.1} parent=39 // pred_check_branch
        %1272 = sbr.rel (%p1270) target = $region44
      $region43: #{tpu_custom_call.1} parent=39 // pred_region
        %s1273 = smul.u32 57, %s15
        %p1274 = scmp.lt.s32.totalorder %s1273, 227
        %s1275 = scalar_select %p1274, %s1273, 227
        %s1276 = smul.addr %s1275, 8
        %s1277 = scalar_lea.vmem %s3, %s1276
      $region44: #{tpu_custom_call.1} parent=39 // pred_fallthru
        _
    $region40: #{tpu_custom_call.1} parent=5 // pred_fallthru
      _
  $region6: #{tpu_custom_call.1} parent=0 // loop_footer
    %s13 = sadd.s32 1, %s9
  $region7: #{tpu_custom_call.1} parent=0 // loop_footer_branch
    %8 = sbr.rel target = $region3
  $region8: #{tpu_custom_call.1} parent=0 // loop_exit
    _

</llo_original>
